<compile_context>
chip_gen: v6e
topology: v6e:2x2x1
jax: 0.10.0
libtpu: 0.0.40
codegen_flags: <defaults>
</compile_context>

<pallas_src>
import jax
import jax.numpy as jnp
from jax import lax
from jax.experimental import pallas as pl
from jax.experimental.pallas import tpu as pltpu


def _round_up(x, m):
    return ((x + m - 1) // m) * m


def ncf_mlp_kernel(x_ref, w1_ref, b1_ref, w2_ref, b2_ref, w3_ref, b3_ref,
                   wo_ref, bo_ref, out_ref):
    """Fused NCF MLP on one batch tile, transposed layout [features, TB].

    x_ref        : [TB, 2E]  merged (user | item) embedding tile
    w1           : [H1, 2E]  first Linear (concat already merged)
    w2, w3       : [H2, H1], [H3, H2]
    b1, b2, b3   : [H?, 1]   biases (f32, broadcast over lanes)
    wo           : [H3, 1]   output-layer weight (column)
    bo           : [1, 1]
    out_ref      : [1, TB]   lane-dense predictions for this tile
    """
    f32 = jnp.float32
    wdt = w2_ref.dtype

    # Layer 1: single K=2E dot.  Contracting the minor axis of BOTH operands
    # (the q@k^T MXU pattern) keeps the batch on the lane axis of the result.
    h = lax.dot_general(w1_ref[...], x_ref[...],
                        (((1,), (1,)), ((), ())),
                        preferred_element_type=f32)           # [H1, TB]
    h = jnp.maximum(h + b1_ref[...], 0.0).astype(wdt)

    # Layer 2.
    h = jnp.dot(w2_ref[...], h, preferred_element_type=f32) + b2_ref[...]
    h = jnp.maximum(h, 0.0).astype(wdt)                       # [H2, TB]

    # Layer 3.
    h = jnp.dot(w3_ref[...], h, preferred_element_type=f32) + b3_ref[...]
    h = jnp.maximum(h, 0.0)                                   # [H3, TB] f32

    # Output layer (out_features == 1): VPU multiply + sublane reduce keeps
    # the result lane-dense; no MXU pass, no [TB, 1] masked store.
    out = jnp.sum(h * wo_ref[...].astype(f32), axis=0, keepdims=True)
    out_ref[...] = (out + bo_ref[...]).astype(out_ref.dtype)


_WEIGHT_KEYS = ("w1", "b1", "w2", "b2", "w3", "b3", "wo", "bo")


def _pick_batch_tile(batch, block_b):
    """Large tile (amortize ~0.35us/step overhead) but keep >=4 grid steps for
    big batches so v7x megacore + the BlockSpec pipeline have work; never
    shrink below 512 when applying that floor."""
    b128 = _round_up(max(batch, 1), 128)
    tb = min(_round_up(block_b, 128), b128)
    while b128 // tb < 4 and tb > 512:
        tb = max(512, _round_up(tb // 2, 128))
    return tb


def _vmem_limit_bytes(params, tb):
    """Tile-derived scoped-VMEM request (no 16 MiB floor, 48 MiB cap)."""
    two_e = params["w1"].shape[1]
    hidden = (params["w1"].shape[0], params["w2"].shape[0],
              params["w3"].shape[0])
    in_bytes = params["w1"].dtype.itemsize
    # Double-buffered [tb, 2E] input tile + double-buffered [1, tb] f32 output.
    stream = 2 * tb * two_e * in_bytes + 2 * tb * 4
    weights = sum(int(params[k].size) * params[k].dtype.itemsize
                  for k in _WEIGHT_KEYS)
    # f32 activations; x2 for elementwise temporaries kept live.
    acts = 2 * sum(h * tb * 4 for h in hidden)
    est = stream + weights + acts + (8 << 20)   # headroom for internal scratch
    return int(min(48 << 20, est))


def ncf_forward(user_indices, item_indices, params, *, block_b=2048):
    """NCF forward: one row-major gather in XLA, fused batch-tiled MLP in Pallas."""
    table = params["embedding"]                  # [num_users + num_items, E]
    num_users = params["num_users"]
    two_e = params["w1"].shape[1]
    batch = user_indices.shape[0]

    tb = _pick_batch_tile(batch, block_b)
    b_pad = _round_up(batch, tb)
    if b_pad != batch:
        pad = b_pad - batch
        user_indices = jnp.pad(user_indices, (0, pad))
        item_indices = jnp.pad(item_indices, (0, pad))

    # Row-major (axis-0) gather from the combined table; interleaving the
    # (user, item) rows yields the merged [B, 2E] layer-1 input via a free
    # reshape -- no concat and no lane-axis gather.
    idx = jnp.stack([user_indices, item_indices + num_users], axis=1).reshape(-1)
    x = jnp.take(table, idx, axis=0).reshape(b_pad, two_e)
    # TODO(synk): fuse this gather into the kernel (scalar-prefetch indices +
    # manual DMA gather from HBM) to eliminate the [B, 2E] HBM round trip.

    weights = [params[k] for k in _WEIGHT_KEYS]

    in_specs = [pl.BlockSpec((tb, two_e), lambda i: (i, 0))]
    # Constant block index => weights/biases fetched once, resident in VMEM.
    in_specs += [pl.BlockSpec(w.shape, lambda i: (0, 0)) for w in weights]

    h1, h2, h3 = (params["w1"].shape[0], params["w2"].shape[0],
                  params["w3"].shape[0])
    flops = 2 * b_pad * (h1 * two_e + h2 * h1 + h3 * h2 + h3)
    w_bytes = sum(int(w.size) * w.dtype.itemsize for w in weights)
    cost = pl.CostEstimate(
        flops=int(flops),
        transcendentals=0,
        bytes_accessed=int(b_pad * two_e * x.dtype.itemsize + b_pad * 4 + w_bytes),
    )

    out = pl.pallas_call(
        ncf_mlp_kernel,
        out_shape=jax.ShapeDtypeStruct((1, b_pad), jnp.float32),
        grid=(b_pad // tb,),
        in_specs=in_specs,
        out_specs=pl.BlockSpec((1, tb), lambda i: (0, i)),
        compiler_params=pltpu.CompilerParams(
            dimension_semantics=("parallel",),
            vmem_limit_bytes=_vmem_limit_bytes(params, tb),
        ),
        cost_estimate=cost,
    )(x, *weights)

    return out[0, :batch]                        # matches output.squeeze()


def init_params(key, num_users, num_items, embedding_dim=64,
                layers=(128, 64, 32), param_dtype=jnp.bfloat16):
    """Matches the PyTorch _init_weights: Normal(0, 0.01) for embeddings and
    Linear weights, zeros for biases.  The user and item embedding tables are
    stored stacked row-major in one [num_users + num_items, E] table (rows
    [0, num_users) = users) so the forward pass needs a single axis-0 gather.
    The first Linear weight is the merged [H1, 2E] matrix (concat order:
    user features then item features).  Weights use `param_dtype` (bf16 halves
    the dominant HBM stream); biases stay float32.
    """
    h1, h2, h3 = layers
    keys = jax.random.split(key, 6)
    p = {}
    p["embedding"] = (0.01 * jax.random.normal(
        keys[0], (num_users + num_items, embedding_dim),
        jnp.float32)).astype(param_dtype)
    p["num_users"] = num_users

    p["w1"] = (0.01 * jax.random.normal(
        keys[1], (h1, 2 * embedding_dim), jnp.float32)).astype(param_dtype)
    p["b1"] = jnp.zeros((h1, 1), jnp.float32)
    p["w2"] = (0.01 * jax.random.normal(
        keys[2], (h2, h1), jnp.float32)).astype(param_dtype)
    p["b2"] = jnp.zeros((h2, 1), jnp.float32)
    p["w3"] = (0.01 * jax.random.normal(
        keys[3], (h3, h2), jnp.float32)).astype(param_dtype)
    p["b3"] = jnp.zeros((h3, 1), jnp.float32)
    p["wo"] = (0.01 * jax.random.normal(
        keys[4], (h3, 1), jnp.float32)).astype(param_dtype)
    p["bo"] = jnp.zeros((1, 1), jnp.float32)
    return p


def ncf_reference(user_indices, item_indices, params):
    """Pure-JAX reference using the same (bf16-stored) parameters."""
    f32 = jnp.float32
    wdt = params["w2"].dtype
    nu = params["num_users"]
    idx = jnp.stack([user_indices, item_indices + nu], axis=1).reshape(-1)
    x = jnp.take(params["embedding"], idx, axis=0).astype(f32)
    x = x.reshape(user_indices.shape[0], -1)                       # [B, 2E]
    h = x @ params["w1"].astype(f32).T + params["b1"][:, 0]
    h = jnp.maximum(h, 0.0).astype(wdt).astype(f32)
    h = jnp.maximum(h @ params["w2"].astype(f32).T + params["b2"][:, 0], 0.0)
    h = h.astype(wdt).astype(f32)
    h = jnp.maximum(h @ params["w3"].astype(f32).T + params["b3"][:, 0], 0.0)
    return h @ params["wo"].astype(f32)[:, 0] + params["bo"][0, 0]


if __name__ == "__main__":
    key = jax.random.PRNGKey(0)
    pkey, ukey, ikey = jax.random.split(key, 3)

    num_users, num_items = 50, 40
    embedding_dim = 64
    batch = 8

    params = init_params(pkey, num_users, num_items, embedding_dim)

    user_indices = jax.random.randint(ukey, (batch,), 0, num_users, jnp.int32)
    item_indices = jax.random.randint(ikey, (batch,), 0, num_items, jnp.int32)

    preds = jax.jit(ncf_forward)(user_indices, item_indices, params)
    jax.block_until_ready(preds)

    assert preds.shape == (batch,), preds.shape
    assert preds.dtype == jnp.float32, preds.dtype

    expected = ncf_reference(user_indices, item_indices, params)
    assert jnp.allclose(preds, expected, rtol=5e-3, atol=1e-8), (preds, expected)

    print("KERNEL_OK")
</pallas_src>

<mosaic_0001>
module attributes {stable_mosaic.version = 11 : i64} {
  func.func @ncf_mlp_kernel(%arg0: i32, %arg1: memref<128x128xbf16, #tpu.memory_space<vmem>>, %arg2: memref<128x128xbf16, #tpu.memory_space<vmem>>, %arg3: memref<128x1xf32, #tpu.memory_space<vmem>>, %arg4: memref<64x128xbf16, #tpu.memory_space<vmem>>, %arg5: memref<64x1xf32, #tpu.memory_space<vmem>>, %arg6: memref<32x64xbf16, #tpu.memory_space<vmem>>, %arg7: memref<32x1xf32, #tpu.memory_space<vmem>>, %arg8: memref<32x1xbf16, #tpu.memory_space<vmem>>, %arg9: memref<1x1xf32, #tpu.memory_space<vmem>>, %arg10: memref<1x128xf32, #tpu.memory_space<vmem>>) attributes {dimension_semantics = [#tpu.dimension_semantics<parallel>], iteration_bounds = array<i64: 1>, scalar_prefetch = 0 : i64, scratch_operands = 0 : i64, tpu.core_type = #tpu.core_type<tc>, window_params = [{transform_indices = @transform_0, window_bounds = array<i64: 128, 128>}, {pipeline_mode = #tpu.pipeline_mode<synchronous>, transform_indices = @transform_1, window_bounds = array<i64: 128, 128>}, {pipeline_mode = #tpu.pipeline_mode<synchronous>, transform_indices = @transform_2, window_bounds = array<i64: 128, 1>}, {pipeline_mode = #tpu.pipeline_mode<synchronous>, transform_indices = @transform_3, window_bounds = array<i64: 64, 128>}, {pipeline_mode = #tpu.pipeline_mode<synchronous>, transform_indices = @transform_4, window_bounds = array<i64: 64, 1>}, {pipeline_mode = #tpu.pipeline_mode<synchronous>, transform_indices = @transform_5, window_bounds = array<i64: 32, 64>}, {pipeline_mode = #tpu.pipeline_mode<synchronous>, transform_indices = @transform_6, window_bounds = array<i64: 32, 1>}, {pipeline_mode = #tpu.pipeline_mode<synchronous>, transform_indices = @transform_7, window_bounds = array<i64: 32, 1>}, {pipeline_mode = #tpu.pipeline_mode<synchronous>, transform_indices = @transform_8, window_bounds = array<i64: 1, 1>}, {transform_indices = @transform_9, window_bounds = array<i64: 1, 128>}]} {
    %c0 = arith.constant 0 : index
    %c0_0 = arith.constant 0 : index
    %0 = vector.load %arg2[%c0, %c0_0] : memref<128x128xbf16, #tpu.memory_space<vmem>>, vector<128x128xbf16>
    %c0_1 = arith.constant 0 : index
    %c0_2 = arith.constant 0 : index
    %1 = vector.load %arg1[%c0_1, %c0_2] : memref<128x128xbf16, #tpu.memory_space<vmem>>, vector<128x128xbf16>
    %cst = arith.constant dense<0.000000e+00> : vector<128x128xf32>
    %2 = tpu.matmul %0, %1, %cst {dimension_numbers = #tpu.dot_dimension_numbers<[1], [1], [0], [0], [0, 0, 1, 0], [], []>} : vector<128x128xbf16>, vector<128x128xbf16>, vector<128x128xf32> -> vector<128x128xf32>
    %c0_3 = arith.constant 0 : index
    %c0_4 = arith.constant 0 : index
    %3 = vector.load %arg3[%c0_3, %c0_4] : memref<128x1xf32, #tpu.memory_space<vmem>>, vector<128x1xf32>
    %4 = vector.broadcast %3 : vector<128x1xf32> to vector<128x128xf32>
    %5 = arith.addf %2, %4 : vector<128x128xf32>
    %cst_5 = arith.constant 0.000000e+00 : f32
    %6 = vector.broadcast %cst_5 : f32 to vector<128x128xf32>
    %7 = arith.maximumf %5, %6 : vector<128x128xf32>
    %8 = arith.truncf %7 : vector<128x128xf32> to vector<128x128xbf16>
    %c0_6 = arith.constant 0 : index
    %c0_7 = arith.constant 0 : index
    %9 = vector.load %arg4[%c0_6, %c0_7] : memref<64x128xbf16, #tpu.memory_space<vmem>>, vector<64x128xbf16>
    %cst_8 = arith.constant dense<0.000000e+00> : vector<64x128xf32>
    %10 = tpu.matmul %9, %8, %cst_8 {dimension_numbers = #tpu.dot_dimension_numbers<[1], [0], [0], [1], [0, 0, 1, 1], [], []>} : vector<64x128xbf16>, vector<128x128xbf16>, vector<64x128xf32> -> vector<64x128xf32>
    %c0_9 = arith.constant 0 : index
    %c0_10 = arith.constant 0 : index
    %11 = vector.load %arg5[%c0_9, %c0_10] : memref<64x1xf32, #tpu.memory_space<vmem>>, vector<64x1xf32>
    %12 = vector.broadcast %11 : vector<64x1xf32> to vector<64x128xf32>
    %13 = arith.addf %10, %12 : vector<64x128xf32>
    %cst_11 = arith.constant 0.000000e+00 : f32
    %14 = vector.broadcast %cst_11 : f32 to vector<64x128xf32>
    %15 = arith.maximumf %13, %14 : vector<64x128xf32>
    %16 = arith.truncf %15 : vector<64x128xf32> to vector<64x128xbf16>
    %c0_12 = arith.constant 0 : index
    %c0_13 = arith.constant 0 : index
    %17 = vector.load %arg6[%c0_12, %c0_13] : memref<32x64xbf16, #tpu.memory_space<vmem>>, vector<32x64xbf16>
    %cst_14 = arith.constant dense<0.000000e+00> : vector<32x128xf32>
    %18 = tpu.matmul %17, %16, %cst_14 {dimension_numbers = #tpu.dot_dimension_numbers<[1], [0], [0], [1], [0, 0, 1, 1], [], []>} : vector<32x64xbf16>, vector<64x128xbf16>, vector<32x128xf32> -> vector<32x128xf32>
    %c0_15 = arith.constant 0 : index
    %c0_16 = arith.constant 0 : index
    %19 = vector.load %arg7[%c0_15, %c0_16] : memref<32x1xf32, #tpu.memory_space<vmem>>, vector<32x1xf32>
    %20 = vector.broadcast %19 : vector<32x1xf32> to vector<32x128xf32>
    %21 = arith.addf %18, %20 : vector<32x128xf32>
    %cst_17 = arith.constant 0.000000e+00 : f32
    %22 = vector.broadcast %cst_17 : f32 to vector<32x128xf32>
    %23 = arith.maximumf %21, %22 : vector<32x128xf32>
    %c0_18 = arith.constant 0 : index
    %c0_19 = arith.constant 0 : index
    %24 = vector.load %arg8[%c0_18, %c0_19] : memref<32x1xbf16, #tpu.memory_space<vmem>>, vector<32x1xbf16>
    %25 = arith.extf %24 : vector<32x1xbf16> to vector<32x1xf32>
    %26 = vector.broadcast %25 : vector<32x1xf32> to vector<32x128xf32>
    %27 = arith.mulf %23, %26 : vector<32x128xf32>
    %cst_20 = arith.constant dense<0.000000e+00> : vector<128xf32>
    %28 = vector.multi_reduction <add>, %27, %cst_20 [0] : vector<32x128xf32> to vector<128xf32>
    %29 = vector.shape_cast %28 : vector<128xf32> to vector<1x128xf32>
    %c0_21 = arith.constant 0 : index
    %c0_22 = arith.constant 0 : index
    %30 = vector.load %arg9[%c0_21, %c0_22] : memref<1x1xf32, #tpu.memory_space<vmem>>, vector<1x1xf32>
    %31 = vector.broadcast %30 : vector<1x1xf32> to vector<1x128xf32>
    %32 = arith.addf %29, %31 : vector<1x128xf32>
    %c0_23 = arith.constant 0 : index
    %c0_24 = arith.constant 0 : index
    %33 = vector.load %arg10[%c0_23, %c0_24] : memref<1x128xf32, #tpu.memory_space<vmem>>, vector<1x128xf32>
    tpu.vector_store %arg10[%c0_23, %c0_24], %32 {strides = array<i32>} : memref<1x128xf32, #tpu.memory_space<vmem>>, vector<1x128xf32>,
    return
  }
  func.func @transform_0(%arg0: i32) -> (i32, i32) {
    %c0_i32 = arith.constant 0 : i32
    %c0_i32_0 = arith.constant 0 : i32
    return %arg0, %c0_i32 : i32, i32
  }
  func.func @transform_1(%arg0: i32) -> (i32, i32) {
    %c0_i32 = arith.constant 0 : i32
    %c0_i32_0 = arith.constant 0 : i32
    %c0_i32_1 = arith.constant 0 : i32
    return %c0_i32, %c0_i32_0 : i32, i32
  }
  func.func @transform_2(%arg0: i32) -> (i32, i32) {
    %c0_i32 = arith.constant 0 : i32
    %c0_i32_0 = arith.constant 0 : i32
    %c0_i32_1 = arith.constant 0 : i32
    return %c0_i32, %c0_i32_0 : i32, i32
  }
  func.func @transform_3(%arg0: i32) -> (i32, i32) {
    %c0_i32 = arith.constant 0 : i32
    %c0_i32_0 = arith.constant 0 : i32
    %c0_i32_1 = arith.constant 0 : i32
    return %c0_i32, %c0_i32_0 : i32, i32
  }
  func.func @transform_4(%arg0: i32) -> (i32, i32) {
    %c0_i32 = arith.constant 0 : i32
    %c0_i32_0 = arith.constant 0 : i32
    %c0_i32_1 = arith.constant 0 : i32
    return %c0_i32, %c0_i32_0 : i32, i32
  }
  func.func @transform_5(%arg0: i32) -> (i32, i32) {
    %c0_i32 = arith.constant 0 : i32
    %c0_i32_0 = arith.constant 0 : i32
    %c0_i32_1 = arith.constant 0 : i32
    return %c0_i32, %c0_i32_0 : i32, i32
  }
  func.func @transform_6(%arg0: i32) -> (i32, i32) {
    %c0_i32 = arith.constant 0 : i32
    %c0_i32_0 = arith.constant 0 : i32
    %c0_i32_1 = arith.constant 0 : i32
    return %c0_i32, %c0_i32_0 : i32, i32
  }
  func.func @transform_7(%arg0: i32) -> (i32, i32) {
    %c0_i32 = arith.constant 0 : i32
    %c0_i32_0 = arith.constant 0 : i32
    %c0_i32_1 = arith.constant 0 : i32
    return %c0_i32, %c0_i32_0 : i32, i32
  }
  func.func @transform_8(%arg0: i32) -> (i32, i32) {
    %c0_i32 = arith.constant 0 : i32
    %c0_i32_0 = arith.constant 0 : i32
    %c0_i32_1 = arith.constant 0 : i32
    return %c0_i32, %c0_i32_0 : i32, i32
  }
  func.func @transform_9(%arg0: i32) -> (i32, i32) {
    %c0_i32 = arith.constant 0 : i32
    %c0_i32_0 = arith.constant 0 : i32
    return %c0_i32, %arg0 : i32, i32
  }
}

</mosaic_0001>

<llo_original>
// kernel: ncf_forward.1
$region0: #{ncf_forward.1}
  #allocation0 [shape = 'u32[]', space=smem, size = 0x4, offset = 0x4, fixed_abs, tag = 'smem constant byte address 0x4 - core index']
  #allocation1 [shape = 'u32[144,128]{1,0:T(1,128)}', space=vmem, size = 0x12000, scoped, tag = 'internal scratch']
  #allocation2 [shape = 'f32[1,1]{1,0:T(1,128)S(1)}', space=vmem, size = 0x200, scoped, tag = 'scoped memory for ncf_forward.1']
  %s0 = inlined_call_operand.vmem [shape: bf16[128,128], index: 0, kind: input, shape index: {}]
  %s1 = inlined_call_operand.vmem [shape: bf16[128,128], index: 1, kind: input, shape index: {}]
  %s2 = inlined_call_operand.vmem [shape: f32[128,1], index: 2, kind: input, shape index: {}]
  %s3 = inlined_call_operand.vmem [shape: bf16[64,128], index: 3, kind: input, shape index: {}]
  %s4 = inlined_call_operand.vmem [shape: f32[64,1], index: 4, kind: input, shape index: {}]
  %s5 = inlined_call_operand.vmem [shape: bf16[32,64], index: 5, kind: input, shape index: {}]
  %s6 = inlined_call_operand.vmem [shape: f32[32,1], index: 6, kind: input, shape index: {}]
  %s7 = inlined_call_operand.vmem [shape: bf16[32,1], index: 7, kind: input, shape index: {}]
  %s8 = inlined_call_operand.<no memory space> [shape: f32[1,1], index: 8, kind: input, shape index: {}]
  %s9 = inlined_call_operand.vmem [shape: f32[1,128], index: 9, kind: output, shape index: {}]
  %s10 = sld [smem:[#allocation0]]
  $region46: #{ncf_forward.1} parent=0
    _
  %s12 = ssub.s32 1, %s10
  %s13 = scalar_select 0, %s12, %s10
  %v14 = vstv %s8
  %15 = vst [vmem:[#allocation2] sm:$0x1] %v14
  // Predicated region
  $region2: #{ncf_forward.1} parent=0 // pred_check
    _
  $region3: #{ncf_forward.1} parent=0 // pred_check_branch
    %17 = sbr.rel (0) target = $region5
  $region4: #{ncf_forward.1} parent=0 // pred_region
    _
  $region5: #{ncf_forward.1} parent=0 // pred_fallthru
    _
  // Predicated region
  $region6: #{ncf_forward.1} parent=0 // pred_check
    _
  $region7: #{ncf_forward.1} parent=0 // pred_check_branch
    %19 = sbr.rel (0) target = $region9
  $region8: #{ncf_forward.1} parent=0 // pred_region
    _
  $region9: #{ncf_forward.1} parent=0 // pred_fallthru
    _
  // Predicated region
  $region10: #{ncf_forward.1} parent=0 // pred_check
    _
  $region11: #{ncf_forward.1} parent=0 // pred_check_branch
    %21 = sbr.rel (0) target = $region13
  $region12: #{ncf_forward.1} parent=0 // pred_region
    _
  $region13: #{ncf_forward.1} parent=0 // pred_fallthru
    _
  // Predicated region
  $region14: #{ncf_forward.1} parent=0 // pred_check
    _
  $region15: #{ncf_forward.1} parent=0 // pred_check_branch
    %23 = sbr.rel (0) target = $region17
  $region16: #{ncf_forward.1} parent=0 // pred_region
    _
  $region17: #{ncf_forward.1} parent=0 // pred_fallthru
    _
  // Predicated region
  $region18: #{ncf_forward.1} parent=0 // pred_check
    _
  $region19: #{ncf_forward.1} parent=0 // pred_check_branch
    %25 = sbr.rel (0) target = $region21
  $region20: #{ncf_forward.1} parent=0 // pred_region
    _
  $region21: #{ncf_forward.1} parent=0 // pred_fallthru
    _
  // Predicated region
  $region22: #{ncf_forward.1} parent=0 // pred_check
    _
  $region23: #{ncf_forward.1} parent=0 // pred_check_branch
    %27 = sbr.rel (0) target = $region25
  $region24: #{ncf_forward.1} parent=0 // pred_region
    _
  $region25: #{ncf_forward.1} parent=0 // pred_fallthru
    _
  // Predicated region
  $region26: #{ncf_forward.1} parent=0 // pred_check
    _
  $region27: #{ncf_forward.1} parent=0 // pred_check_branch
    %29 = sbr.rel (0) target = $region29
  $region28: #{ncf_forward.1} parent=0 // pred_region
    _
  $region29: #{ncf_forward.1} parent=0 // pred_fallthru
    _
  // Predicated region
  $region30: #{ncf_forward.1} parent=0 // pred_check
    _
  $region31: #{ncf_forward.1} parent=0 // pred_check_branch
    %31 = sbr.rel (0) target = $region33
  $region32: #{ncf_forward.1} parent=0 // pred_region
    _
  $region33: #{ncf_forward.1} parent=0 // pred_fallthru
    _
  // Predicated region
  $region34: #{ncf_forward.1} parent=0 // pred_check
    _
  $region35: #{ncf_forward.1} parent=0 // pred_check_branch
    %33 = sbr.rel (0) target = $region37
  $region36: #{ncf_forward.1} parent=0 // pred_region
    _
  $region37: #{ncf_forward.1} parent=0 // pred_fallthru
    _
  %v35 = vld [vmem:[%s1] sm:$0xf]
  %v36 = vld [vmem:[%s1 + $0x4] sm:$0xf]
  %v37 = vld [vmem:[%s1 + $0x8] sm:$0xf]
  %v38 = vld [vmem:[%s1 + $0xc] sm:$0xf]
  %v39 = vld [vmem:[%s1 + $0x10] sm:$0xf]
  %v40 = vld [vmem:[%s1 + $0x14] sm:$0xf]
  %v41 = vld [vmem:[%s1 + $0x18] sm:$0xf]
  %v42 = vld [vmem:[%s1 + $0x1c] sm:$0xf]
  %v43 = vld [vmem:[%s1 + $0x20] sm:$0xf]
  %v44 = vld [vmem:[%s1 + $0x24] sm:$0xf]
  %v45 = vld [vmem:[%s1 + $0x28] sm:$0xf]
  %v46 = vld [vmem:[%s1 + $0x2c] sm:$0xf]
  %v47 = vld [vmem:[%s1 + $0x30] sm:$0xf]
  %v48 = vld [vmem:[%s1 + $0x34] sm:$0xf]
  %v49 = vld [vmem:[%s1 + $0x38] sm:$0xf]
  %v50 = vld [vmem:[%s1 + $0x3c] sm:$0xf]
  %v51 = vld [vmem:[%s0] sm:$0xf]
  %v52 = vld [vmem:[%s0 + $0x4] sm:$0xf]
  %v53 = vld [vmem:[%s0 + $0x8] sm:$0xf]
  %v54 = vld [vmem:[%s0 + $0xc] sm:$0xf]
  %v55 = vld [vmem:[%s0 + $0x10] sm:$0xf]
  %v56 = vld [vmem:[%s0 + $0x14] sm:$0xf]
  %v57 = vld [vmem:[%s0 + $0x18] sm:$0xf]
  %v58 = vld [vmem:[%s0 + $0x1c] sm:$0xf]
  %v59 = vld [vmem:[%s0 + $0x20] sm:$0xf]
  %v60 = vld [vmem:[%s0 + $0x24] sm:$0xf]
  %v61 = vld [vmem:[%s0 + $0x28] sm:$0xf]
  %v62 = vld [vmem:[%s0 + $0x2c] sm:$0xf]
  %v63 = vld [vmem:[%s0 + $0x30] sm:$0xf]
  %v64 = vld [vmem:[%s0 + $0x34] sm:$0xf]
  %v65 = vld [vmem:[%s0 + $0x38] sm:$0xf]
  %v66 = vld [vmem:[%s0 + $0x3c] sm:$0xf]
  %v67 = vld [vmem:[%s2] sm:$0xff]
  %v68 = vld [vmem:[%s2 + $0x8] sm:$0xff]
  %v69 = vld [vmem:[%s2 + $0x10] sm:$0xff]
  %v70 = vld [vmem:[%s2 + $0x18] sm:$0xff]
  %v71 = vld [vmem:[%s2 + $0x20] sm:$0xff]
  %v72 = vld [vmem:[%s2 + $0x28] sm:$0xff]
  %v73 = vld [vmem:[%s2 + $0x30] sm:$0xff]
  %v74 = vld [vmem:[%s2 + $0x38] sm:$0xff]
  %v75 = vld [vmem:[%s2 + $0x40] sm:$0xff]
  %v76 = vld [vmem:[%s2 + $0x48] sm:$0xff]
  %v77 = vld [vmem:[%s2 + $0x50] sm:$0xff]
  %v78 = vld [vmem:[%s2 + $0x58] sm:$0xff]
  %v79 = vld [vmem:[%s2 + $0x60] sm:$0xff]
  %v80 = vld [vmem:[%s2 + $0x68] sm:$0xff]
  %v81 = vld [vmem:[%s2 + $0x70] sm:$0xff]
  %v82 = vld [vmem:[%s2 + $0x78] sm:$0xff]
  %84 = vset.pattern.permute.xlu0 0
  %85 = vperm.xlu0 %84, %v67
  %v86 = vpop.permute.xlu0 %85
  %89 = vset.pattern.permute.xlu0 0
  %90 = vperm.xlu0 %89, %v68
  %v91 = vpop.permute.xlu0 %90
  %94 = vset.pattern.permute.xlu0 0
  %95 = vperm.xlu0 %94, %v69
  %v96 = vpop.permute.xlu0 %95
  %99 = vset.pattern.permute.xlu0 0
  %100 = vperm.xlu0 %99, %v70
  %v101 = vpop.permute.xlu0 %100
  %104 = vset.pattern.permute.xlu0 0
  %105 = vperm.xlu0 %104, %v71
  %v106 = vpop.permute.xlu0 %105
  %109 = vset.pattern.permute.xlu0 0
  %110 = vperm.xlu0 %109, %v72
  %v111 = vpop.permute.xlu0 %110
  %114 = vset.pattern.permute.xlu0 0
  %115 = vperm.xlu0 %114, %v73
  %v116 = vpop.permute.xlu0 %115
  %119 = vset.pattern.permute.xlu0 0
  %120 = vperm.xlu0 %119, %v74
  %v121 = vpop.permute.xlu0 %120
  %124 = vset.pattern.permute.xlu0 0
  %125 = vperm.xlu0 %124, %v75
  %v126 = vpop.permute.xlu0 %125
  %129 = vset.pattern.permute.xlu0 0
  %130 = vperm.xlu0 %129, %v76
  %v131 = vpop.permute.xlu0 %130
  %134 = vset.pattern.permute.xlu0 0
  %135 = vperm.xlu0 %134, %v77
  %v136 = vpop.permute.xlu0 %135
  %139 = vset.pattern.permute.xlu0 0
  %140 = vperm.xlu0 %139, %v78
  %v141 = vpop.permute.xlu0 %140
  %144 = vset.pattern.permute.xlu0 0
  %145 = vperm.xlu0 %144, %v79
  %v146 = vpop.permute.xlu0 %145
  %149 = vset.pattern.permute.xlu0 0
  %150 = vperm.xlu0 %149, %v80
  %v151 = vpop.permute.xlu0 %150
  %154 = vset.pattern.permute.xlu0 0
  %155 = vperm.xlu0 %154, %v81
  %v156 = vpop.permute.xlu0 %155
  %159 = vset.pattern.permute.xlu0 0
  %160 = vperm.xlu0 %159, %v82
  %v161 = vpop.permute.xlu0 %160
  %v179 = vunpack.c.l.b16 %v35
  %v180 = vunpack.c.l.b16 %v36
  %v181 = vunpack.c.l.b16 %v37
  %v182 = vunpack.c.l.b16 %v38
  %v183 = vunpack.c.l.b16 %v39
  %v184 = vunpack.c.l.b16 %v40
  %v185 = vunpack.c.l.b16 %v41
  %v186 = vunpack.c.l.b16 %v42
  %v187 = vunpack.c.l.b16 %v43
  %v188 = vunpack.c.l.b16 %v44
  %v189 = vunpack.c.l.b16 %v45
  %v190 = vunpack.c.l.b16 %v46
  %v191 = vunpack.c.l.b16 %v47
  %v192 = vunpack.c.l.b16 %v48
  %v193 = vunpack.c.l.b16 %v49
  %v194 = vunpack.c.l.b16 %v50
  %v195 = vpack.c.b16 %v180, %v179
  %v196 = vpack.c.b16 %v182, %v181
  %v197 = vpack.c.b16 %v184, %v183
  %v198 = vpack.c.b16 %v186, %v185
  %v199 = vpack.c.b16 %v188, %v187
  %v200 = vpack.c.b16 %v190, %v189
  %v201 = vpack.c.b16 %v192, %v191
  %v202 = vpack.c.b16 %v194, %v193
  %v227 = vunpack.c.l.b16 %v51
  %v228 = vunpack.c.l.b16 %v52
  %v229 = vunpack.c.l.b16 %v53
  %v230 = vunpack.c.l.b16 %v54
  %v231 = vunpack.c.l.b16 %v55
  %v232 = vunpack.c.l.b16 %v56
  %v233 = vunpack.c.l.b16 %v57
  %v234 = vunpack.c.l.b16 %v58
  %v235 = vunpack.c.l.b16 %v59
  %v236 = vunpack.c.l.b16 %v60
  %v237 = vunpack.c.l.b16 %v61
  %v238 = vunpack.c.l.b16 %v62
  %v239 = vunpack.c.l.b16 %v63
  %v240 = vunpack.c.l.b16 %v64
  %v241 = vunpack.c.l.b16 %v65
  %v242 = vunpack.c.l.b16 %v66
  %v243 = vpack.c.b16 %v228, %v227
  %v244 = vpack.c.b16 %v230, %v229
  %v245 = vpack.c.b16 %v232, %v231
  %v246 = vpack.c.b16 %v234, %v233
  %v247 = vpack.c.b16 %v236, %v235
  %v248 = vpack.c.b16 %v238, %v237
  %v249 = vpack.c.b16 %v240, %v239
  %v250 = vpack.c.b16 %v242, %v241
  %259 = vmatprep.subr.bf16.mxu0 0
  %260 = vmatpush1.bf16.xpose.msra.mxu0 %v250
  %261 = vmatprep.subr.bf16.mxu0 0
  %262 = vmatpush1.bf16.xpose.msra.mxu0 %v249
  %263 = vmatprep.subr.bf16.mxu0 0
  %264 = vmatpush1.bf16.xpose.msra.mxu0 %v248
  %265 = vmatprep.subr.bf16.mxu0 0
  %266 = vmatpush1.bf16.xpose.msra.mxu0 %v247
  %267 = vmatprep.subr.bf16.mxu0 0
  %268 = vmatpush1.bf16.xpose.msra.mxu0 %v246
  %269 = vmatprep.subr.bf16.mxu0 0
  %270 = vmatpush1.bf16.xpose.msra.mxu0 %v245
  %271 = vmatprep.subr.bf16.mxu0 0
  %272 = vmatpush1.bf16.xpose.msra.mxu0 %v244
  %273 = vmatprep.subr.bf16.mxu0 0
  %274 = vmatpush1.bf16.xpose.msra.mxu0 %v243
  %275 = vmatprep.subr.bf16.mxu0 0
  %276 = vmatpush2.bf16.xpose.msra.mxu0 0
  %277 = vmatprep.subr.bf16.mxu0 0
  %278 = vmatpush2.bf16.xpose.msra.mxu0 0
  %279 = vmatprep.subr.bf16.mxu0 0
  %280 = vmatpush2.bf16.xpose.msra.mxu0 0
  %281 = vmatprep.subr.bf16.mxu0 0
  %282 = vmatpush2.bf16.xpose.msra.mxu0 0
  %283 = vmatprep.subr.bf16.mxu0 0
  %284 = vmatpush2.bf16.xpose.msra.mxu0 0
  %285 = vmatprep.subr.bf16.mxu0 0
  %286 = vmatpush2.bf16.xpose.msra.mxu0 0
  %287 = vmatprep.subr.bf16.mxu0 0
  %288 = vmatpush2.bf16.xpose.msra.mxu0 0
  %289 = vmatprep.subr.bf16.mxu0 0
  %290 = vmatpush2.bf16.xpose.msra.mxu0 0
  %291 = vmatprep.mubr.bf16.mxu0 0
  %292 = vmatmul.mubr.bf16.gmra.mxu0 %v195
  %v293 = vpop.f32.mrf.mxu0
  %v294 = vadd.f32 %v86, %v293
  %v295 = vpop.f32.mrf.mxu0
  %v296 = vpop.f32.mrf.mxu0
  %v297 = vadd.f32 %v91, %v296
  %v298 = vpop.f32.mrf.mxu0
  %299 = vmatprep.mubr.bf16.mxu0 0
  %300 = vmatmul.mubr.bf16.gmra.mxu0 %v196
  %v301 = vpop.f32.mrf.mxu0
  %v302 = vadd.f32 %v96, %v301
  %v303 = vpop.f32.mrf.mxu0
  %v304 = vpop.f32.mrf.mxu0
  %v305 = vadd.f32 %v101, %v304
  %v306 = vpop.f32.mrf.mxu0
  %307 = vmatprep.mubr.bf16.mxu0 0
  %308 = vmatmul.mubr.bf16.gmra.mxu0 %v197
  %v309 = vpop.f32.mrf.mxu0
  %v310 = vadd.f32 %v106, %v309
  %v311 = vpop.f32.mrf.mxu0
  %v312 = vpop.f32.mrf.mxu0
  %v313 = vadd.f32 %v111, %v312
  %v314 = vpop.f32.mrf.mxu0
  %315 = vmatprep.mubr.bf16.mxu0 0
  %316 = vmatmul.mubr.bf16.gmra.mxu0 %v198
  %v317 = vpop.f32.mrf.mxu0
  %v318 = vadd.f32 %v116, %v317
  %v319 = vpop.f32.mrf.mxu0
  %v320 = vpop.f32.mrf.mxu0
  %v321 = vadd.f32 %v121, %v320
  %v322 = vpop.f32.mrf.mxu0
  %323 = vmatprep.mubr.bf16.mxu0 0
  %324 = vmatmul.mubr.bf16.gmra.mxu0 %v199
  %v325 = vpop.f32.mrf.mxu0
  %v326 = vadd.f32 %v126, %v325
  %v327 = vpop.f32.mrf.mxu0
  %v328 = vpop.f32.mrf.mxu0
  %v329 = vadd.f32 %v131, %v328
  %v330 = vpop.f32.mrf.mxu0
  %331 = vmatprep.mubr.bf16.mxu0 0
  %332 = vmatmul.mubr.bf16.gmra.mxu0 %v200
  %v333 = vpop.f32.mrf.mxu0
  %v334 = vadd.f32 %v136, %v333
  %v335 = vpop.f32.mrf.mxu0
  %v336 = vpop.f32.mrf.mxu0
  %v337 = vadd.f32 %v141, %v336
  %v338 = vpop.f32.mrf.mxu0
  %339 = vmatprep.mubr.bf16.mxu0 0
  %340 = vmatmul.mubr.bf16.gmra.mxu0 %v201
  %v341 = vpop.f32.mrf.mxu0
  %v342 = vadd.f32 %v146, %v341
  %v343 = vpop.f32.mrf.mxu0
  %v344 = vpop.f32.mrf.mxu0
  %v345 = vadd.f32 %v151, %v344
  %v346 = vpop.f32.mrf.mxu0
  %347 = vmatprep.mubr.bf16.mxu0 0
  %348 = vmatmul.mubr.bf16.gmra.mxu0 %v202
  %v349 = vpop.f32.mrf.mxu0
  %v350 = vadd.f32 %v156, %v349
  %v351 = vpop.f32.mrf.mxu0
  %v352 = vpop.f32.mrf.mxu0
  %v353 = vadd.f32 %v161, %v352
  %v354 = vpop.f32.mrf.mxu0
  %355 = vdwg.mxu0
  %v356 = vmax.f32 %v294, 0.0
  %v357 = vmax.f32 %v297, 0.0
  %v358 = vmax.f32 %v302, 0.0
  %v359 = vmax.f32 %v305, 0.0
  %v360 = vmax.f32 %v310, 0.0
  %v361 = vmax.f32 %v313, 0.0
  %v362 = vmax.f32 %v318, 0.0
  %v363 = vmax.f32 %v321, 0.0
  %v364 = vmax.f32 %v326, 0.0
  %v365 = vmax.f32 %v329, 0.0
  %v366 = vmax.f32 %v334, 0.0
  %v367 = vmax.f32 %v337, 0.0
  %v368 = vmax.f32 %v342, 0.0
  %v369 = vmax.f32 %v345, 0.0
  %v370 = vmax.f32 %v350, 0.0
  %v371 = vmax.f32 %v353, 0.0
  %v372 = vpack.c.bf16 %v357, %v356
  %v373 = vpack.c.bf16 %v359, %v358
  %v374 = vpack.c.bf16 %v361, %v360
  %v375 = vpack.c.bf16 %v363, %v362
  %v376 = vpack.c.bf16 %v365, %v364
  %v377 = vpack.c.bf16 %v367, %v366
  %v378 = vpack.c.bf16 %v369, %v368
  %v379 = vpack.c.bf16 %v371, %v370
  %v380 = vld [vmem:[%s3] sm:$0xf]
  %v381 = vld [vmem:[%s3 + $0x4] sm:$0xf]
  %v382 = vld [vmem:[%s3 + $0x8] sm:$0xf]
  %v383 = vld [vmem:[%s3 + $0xc] sm:$0xf]
  %v384 = vld [vmem:[%s3 + $0x10] sm:$0xf]
  %v385 = vld [vmem:[%s3 + $0x14] sm:$0xf]
  %v386 = vld [vmem:[%s3 + $0x18] sm:$0xf]
  %v387 = vld [vmem:[%s3 + $0x1c] sm:$0xf]
  %v388 = vld [vmem:[%s4] sm:$0xff]
  %v389 = vld [vmem:[%s4 + $0x8] sm:$0xff]
  %v390 = vld [vmem:[%s4 + $0x10] sm:$0xff]
  %v391 = vld [vmem:[%s4 + $0x18] sm:$0xff]
  %v392 = vld [vmem:[%s4 + $0x20] sm:$0xff]
  %v393 = vld [vmem:[%s4 + $0x28] sm:$0xff]
  %v394 = vld [vmem:[%s4 + $0x30] sm:$0xff]
  %v395 = vld [vmem:[%s4 + $0x38] sm:$0xff]
  %397 = vset.pattern.permute.xlu0 0
  %398 = vperm.xlu0 %397, %v388
  %v399 = vpop.permute.xlu0 %398
  %402 = vset.pattern.permute.xlu0 0
  %403 = vperm.xlu0 %402, %v389
  %v404 = vpop.permute.xlu0 %403
  %407 = vset.pattern.permute.xlu0 0
  %408 = vperm.xlu0 %407, %v390
  %v409 = vpop.permute.xlu0 %408
  %412 = vset.pattern.permute.xlu0 0
  %413 = vperm.xlu0 %412, %v391
  %v414 = vpop.permute.xlu0 %413
  %417 = vset.pattern.permute.xlu0 0
  %418 = vperm.xlu0 %417, %v392
  %v419 = vpop.permute.xlu0 %418
  %422 = vset.pattern.permute.xlu0 0
  %423 = vperm.xlu0 %422, %v393
  %v424 = vpop.permute.xlu0 %423
  %427 = vset.pattern.permute.xlu0 0
  %428 = vperm.xlu0 %427, %v394
  %v429 = vpop.permute.xlu0 %428
  %432 = vset.pattern.permute.xlu0 0
  %433 = vperm.xlu0 %432, %v395
  %v434 = vpop.permute.xlu0 %433
  %v444 = vunpack.c.l.b16 %v380
  %v445 = vunpack.c.l.b16 %v381
  %v446 = vunpack.c.l.b16 %v382
  %v447 = vunpack.c.l.b16 %v383
  %v448 = vunpack.c.l.b16 %v384
  %v449 = vunpack.c.l.b16 %v385
  %v450 = vunpack.c.l.b16 %v386
  %v451 = vunpack.c.l.b16 %v387
  %v452 = vpack.c.b16 %v445, %v444
  %v453 = vpack.c.b16 %v447, %v446
  %v454 = vpack.c.b16 %v449, %v448
  %v455 = vpack.c.b16 %v451, %v450
  %460 = vmatprep.subr.bf16.mxu0 0
  %461 = vmatpush1.bf16.msra.mxu0 %v379
  %462 = vmatprep.subr.bf16.mxu0 0
  %463 = vmatpush1.bf16.msra.mxu0 %v378
  %464 = vmatprep.subr.bf16.mxu0 0
  %465 = vmatpush1.bf16.msra.mxu0 %v377
  %466 = vmatprep.subr.bf16.mxu0 0
  %467 = vmatpush1.bf16.msra.mxu0 %v376
  %468 = vmatprep.subr.bf16.mxu0 0
  %469 = vmatpush1.bf16.msra.mxu0 %v375
  %470 = vmatprep.subr.bf16.mxu0 0
  %471 = vmatpush1.bf16.msra.mxu0 %v374
  %472 = vmatprep.subr.bf16.mxu0 0
  %473 = vmatpush1.bf16.msra.mxu0 %v373
  %474 = vmatprep.subr.bf16.mxu0 0
  %475 = vmatpush1.bf16.msra.mxu0 %v372
  %476 = vmatprep.subr.bf16.mxu0 0
  %477 = vmatpush2.bf16.msra.mxu0 0
  %478 = vmatprep.subr.bf16.mxu0 0
  %479 = vmatpush2.bf16.msra.mxu0 0
  %480 = vmatprep.subr.bf16.mxu0 0
  %481 = vmatpush2.bf16.msra.mxu0 0
  %482 = vmatprep.subr.bf16.mxu0 0
  %483 = vmatpush2.bf16.msra.mxu0 0
  %484 = vmatprep.subr.bf16.mxu0 0
  %485 = vmatpush2.bf16.msra.mxu0 0
  %486 = vmatprep.subr.bf16.mxu0 0
  %487 = vmatpush2.bf16.msra.mxu0 0
  %488 = vmatprep.subr.bf16.mxu0 0
  %489 = vmatpush2.bf16.msra.mxu0 0
  %490 = vmatprep.subr.bf16.mxu0 0
  %491 = vmatpush2.bf16.msra.mxu0 0
  %492 = vmatprep.mubr.bf16.mxu0 0
  %493 = vmatmul.mubr.bf16.gmra.mxu0 %v452
  %v494 = vpop.f32.mrf.mxu0
  %v495 = vadd.f32 %v399, %v494
  %v496 = vpop.f32.mrf.mxu0
  %v497 = vpop.f32.mrf.mxu0
  %v498 = vadd.f32 %v404, %v497
  %v499 = vpop.f32.mrf.mxu0
  %500 = vmatprep.mubr.bf16.mxu0 0
  %501 = vmatmul.mubr.bf16.gmra.mxu0 %v453
  %v502 = vpop.f32.mrf.mxu0
  %v503 = vadd.f32 %v409, %v502
  %v504 = vpop.f32.mrf.mxu0
  %v505 = vpop.f32.mrf.mxu0
  %v506 = vadd.f32 %v414, %v505
  %v507 = vpop.f32.mrf.mxu0
  %508 = vmatprep.mubr.bf16.mxu0 0
  %509 = vmatmul.mubr.bf16.gmra.mxu0 %v454
  %v510 = vpop.f32.mrf.mxu0
  %v511 = vadd.f32 %v419, %v510
  %v512 = vpop.f32.mrf.mxu0
  %v513 = vpop.f32.mrf.mxu0
  %v514 = vadd.f32 %v424, %v513
  %v515 = vpop.f32.mrf.mxu0
  %516 = vmatprep.mubr.bf16.mxu0 0
  %517 = vmatmul.mubr.bf16.gmra.mxu0 %v455
  %v518 = vpop.f32.mrf.mxu0
  %v519 = vadd.f32 %v429, %v518
  %v520 = vpop.f32.mrf.mxu0
  %v521 = vpop.f32.mrf.mxu0
  %v522 = vadd.f32 %v434, %v521
  %v523 = vpop.f32.mrf.mxu0
  %524 = vdwg.mxu0
  %v525 = vmax.f32 %v495, 0.0
  %v526 = vmax.f32 %v498, 0.0
  %v527 = vmax.f32 %v503, 0.0
  %v528 = vmax.f32 %v506, 0.0
  %v529 = vmax.f32 %v511, 0.0
  %v530 = vmax.f32 %v514, 0.0
  %v531 = vmax.f32 %v519, 0.0
  %v532 = vmax.f32 %v522, 0.0
  %v533 = vpack.c.bf16 %v526, %v525
  %v534 = vpack.c.bf16 %v528, %v527
  %v535 = vpack.c.bf16 %v530, %v529
  %v536 = vpack.c.bf16 %v532, %v531
  %v537 = vld [vmem:[%s5] sm:$0xf]
  %v538 = vld [vmem:[%s5 + $0x4] sm:$0xf]
  %v539 = vld [vmem:[%s5 + $0x8] sm:$0xf]
  %v540 = vld [vmem:[%s5 + $0xc] sm:$0xf]
  %v541 = vld [vmem:[%s6] sm:$0xff]
  %v542 = vld [vmem:[%s6 + $0x8] sm:$0xff]
  %v543 = vld [vmem:[%s6 + $0x10] sm:$0xff]
  %v544 = vld [vmem:[%s6 + $0x18] sm:$0xff]
  %546 = vset.pattern.permute.xlu0 0
  %547 = vperm.xlu0 %546, %v541
  %v548 = vpop.permute.xlu0 %547
  %551 = vset.pattern.permute.xlu0 0
  %552 = vperm.xlu0 %551, %v542
  %v553 = vpop.permute.xlu0 %552
  %556 = vset.pattern.permute.xlu0 0
  %557 = vperm.xlu0 %556, %v543
  %v558 = vpop.permute.xlu0 %557
  %561 = vset.pattern.permute.xlu0 0
  %562 = vperm.xlu0 %561, %v544
  %v563 = vpop.permute.xlu0 %562
  %v569 = vunpack.c.l.b16 %v537
  %v570 = vunpack.c.l.b16 %v538
  %v571 = vunpack.c.l.b16 %v539
  %v572 = vunpack.c.l.b16 %v540
  %v573 = vpack.c.b16 %v570, %v569
  %v574 = vpack.c.b16 %v572, %v571
  %vm575 = vcmask 523264
  %v577 = vsel %vm575, %v573, 0
  %v580 = vsel %vm575, %v574, 0
  %582 = vmatprep.subr.bf16.mxu0 0
  %583 = vmatpush1.bf16.msra.mxu0 0
  %584 = vmatprep.subr.bf16.mxu0 0
  %585 = vmatpush1.bf16.msra.mxu0 0
  %586 = vmatprep.subr.bf16.mxu0 0
  %587 = vmatpush1.bf16.msra.mxu0 0
  %588 = vmatprep.subr.bf16.mxu0 0
  %589 = vmatpush1.bf16.msra.mxu0 0
  %590 = vmatprep.subr.bf16.mxu0 0
  %591 = vmatpush1.bf16.msra.mxu0 %v536
  %592 = vmatprep.subr.bf16.mxu0 0
  %593 = vmatpush1.bf16.msra.mxu0 %v535
  %594 = vmatprep.subr.bf16.mxu0 0
  %595 = vmatpush1.bf16.msra.mxu0 %v534
  %596 = vmatprep.subr.bf16.mxu0 0
  %597 = vmatpush1.bf16.msra.mxu0 %v533
  %598 = vmatprep.subr.bf16.mxu0 0
  %599 = vmatpush2.bf16.msra.mxu0 0
  %600 = vmatprep.subr.bf16.mxu0 0
  %601 = vmatpush2.bf16.msra.mxu0 0
  %602 = vmatprep.subr.bf16.mxu0 0
  %603 = vmatpush2.bf16.msra.mxu0 0
  %604 = vmatprep.subr.bf16.mxu0 0
  %605 = vmatpush2.bf16.msra.mxu0 0
  %606 = vmatprep.subr.bf16.mxu0 0
  %607 = vmatpush2.bf16.msra.mxu0 0
  %608 = vmatprep.subr.bf16.mxu0 0
  %609 = vmatpush2.bf16.msra.mxu0 0
  %610 = vmatprep.subr.bf16.mxu0 0
  %611 = vmatpush2.bf16.msra.mxu0 0
  %612 = vmatprep.subr.bf16.mxu0 0
  %613 = vmatpush2.bf16.msra.mxu0 0
  %614 = vmatprep.mubr.bf16.mxu0 0
  %615 = vmatmul.mubr.bf16.gmra.mxu0 %v577
  %v616 = vpop.f32.mrf.mxu0
  %v617 = vadd.f32 %v548, %v616
  %v618 = vpop.f32.mrf.mxu0
  %v619 = vpop.f32.mrf.mxu0
  %v620 = vadd.f32 %v553, %v619
  %v621 = vpop.f32.mrf.mxu0
  %622 = vmatprep.mubr.bf16.mxu0 0
  %623 = vmatmul.mubr.bf16.gmra.mxu0 %v580
  %v624 = vpop.f32.mrf.mxu0
  %v625 = vadd.f32 %v558, %v624
  %v626 = vpop.f32.mrf.mxu0
  %v627 = vpop.f32.mrf.mxu0
  %v628 = vadd.f32 %v563, %v627
  %v629 = vpop.f32.mrf.mxu0
  %630 = vdwg.mxu0
  %v631 = vmax.f32 %v617, 0.0
  %v632 = vmax.f32 %v620, 0.0
  %v633 = vmax.f32 %v625, 0.0
  %v634 = vmax.f32 %v628, 0.0
  %v635 = vld [vmem:[%s7] sm:$0xf]
  %v636 = vld [vmem:[%s7 + $0x4] sm:$0xf]
  %v637 = vld [vmem:[%s7 + $0x8] sm:$0xf]
  %v638 = vld [vmem:[%s7 + $0xc] sm:$0xf]
  %v639 = vunpack.c.l.bf16 %v635
  %v640 = vunpack.c.l.bf16 %v636
  %v641 = vunpack.c.l.bf16 %v637
  %v642 = vunpack.c.l.bf16 %v638
  %644 = vset.pattern.permute.xlu0 0
  %645 = vperm.xlu0 %644, %v639
  %v646 = vpop.permute.xlu0 %645
  %649 = vset.pattern.permute.xlu0 0
  %650 = vperm.xlu0 %649, %v640
  %v651 = vpop.permute.xlu0 %650
  %654 = vset.pattern.permute.xlu0 0
  %655 = vperm.xlu0 %654, %v641
  %v656 = vpop.permute.xlu0 %655
  %659 = vset.pattern.permute.xlu0 0
  %660 = vperm.xlu0 %659, %v642
  %v661 = vpop.permute.xlu0 %660
  %v663 = vmul.f32 %v631, %v646
  %v664 = vmul.f32 %v632, %v651
  %v665 = vmul.f32 %v633, %v656
  %v666 = vmul.f32 %v634, %v661
  %v667 = vadd.f32 %v663, %v664
  %v668 = vadd.f32 %v667, %v665
  %v669 = vadd.f32 %v668, %v666
  %v670 = vrot.slane %v669, 4
  %v671 = vadd.f32 %v669, %v670
  %v672 = vrot.slane %v671, 2
  %v673 = vadd.f32 %v671, %v672
  %v674 = vrot.slane %v673, 1
  %v675 = vadd.f32 %v673, %v674
  %v676 = vld [vmem:[#allocation2] sm:$0x1]
  %678 = vset.pattern.permute.xlu0 0
  %679 = vperm.xlu0 %678, %v676
  %v680 = vpop.permute.xlu0 %679
  %v682 = vlaneseq
  %v683 = vshrl.u32 %v682, 7
  %v684 = vsub.s32 0, %v683
  %v685 = vrot.slane %v680, %v684
  %v686 = vadd.f32 %v675, %v685
  %687 = vst [vmem:[%s9] sm:$0x1] %v686
  // Predicated region
  $region38: #{ncf_forward.1} parent=0 // pred_check
    _
  $region39: #{ncf_forward.1} parent=0 // pred_check_branch
    %689 = sbr.rel (0) target = $region41
  $region40: #{ncf_forward.1} parent=0 // pred_region
    _
  $region41: #{ncf_forward.1} parent=0 // pred_fallthru
    _
  // Predicated region
  $region42: #{ncf_forward.1} parent=0 // pred_check
    _
  $region43: #{ncf_forward.1} parent=0 // pred_check_branch
    %691 = sbr.rel (0) target = $region45
  $region44: #{ncf_forward.1} parent=0 // pred_region
    _
  $region45: #{ncf_forward.1} parent=0 // pred_fallthru
    _

</llo_original>
